<compile_context>
chip_gen: v5e
topology: v5e:2x2
jax: 0.10.0
libtpu: 0.0.40
codegen_flags: <defaults>
</compile_context>

<pallas_src>
import functools

import jax
import jax.numpy as jnp
from jax import lax
from jax.experimental import pallas as pl
from jax.experimental.pallas import tpu as pltpu


def _lsce_kernel(preds_ref, target_ref, out_ref, *, n_rows, n_classes,
                 tile_rows):
    """Per-tile partial sums for label-smoothing cross-entropy.

    preds_ref : (TB, C)      logits tile (any float dtype; upcast in-kernel)
    target_ref: (TB, 1)      int32 class-index tile
    out_ref   : (1, 8, 128)  f32 per-tile output slab:
                [0,0,0] = sum_i sum_c -logp[i,c]   over this tile's valid rows
                [0,0,1] = sum_i      -logp[i,t_i]  over this tile's valid rows
    """
    i = pl.program_id(0)

    x = preds_ref[...].astype(jnp.float32)                 # (TB, C)
    tgt = target_ref[...]                                  # (TB, 1) int32

    # Mask for remainder rows of the last (partial) tile.
    row = i * tile_rows + lax.broadcasted_iota(jnp.int32, (tile_rows, 1), 0)
    valid = row < n_rows                                   # (TB, 1)
    x = jnp.where(valid, x, 0.0)                           # keep max/exp finite

    # Numerically stable log-sum-exp per row (no logp materialization).
    m = jnp.max(x, axis=-1, keepdims=True)                 # (TB, 1)
    lse = m + jnp.log(jnp.sum(jnp.exp(x - m), axis=-1, keepdims=True))

    rowsum = jnp.sum(x, axis=-1, keepdims=True)            # (TB, 1)
    cls = lax.broadcasted_iota(jnp.int32, x.shape, 1)      # (TB, C)
    gathered = jnp.sum(jnp.where(cls == tgt, x, 0.0), axis=-1, keepdims=True)

    #  sum_c -logp[i,c] = C*lse_i - rowsum_i ;  -logp[i,t_i] = lse_i - x[i,t_i]
    all_part = jnp.sum(jnp.where(valid, n_classes * lse - rowsum, 0.0))
    nll_part = jnp.sum(jnp.where(valid, lse - gathered, 0.0))

    # Lane-dense, unmasked single-vreg store of the two partials.
    sub = lax.broadcasted_iota(jnp.int32, (1, 8, 128), 1)
    lane = lax.broadcasted_iota(jnp.int32, (1, 8, 128), 2)
    first_row = sub == 0
    out_ref[...] = jnp.where(first_row & (lane == 0), all_part,
                             jnp.where(first_row & (lane == 1), nll_part, 0.0))


def _choose_tile_rows(n_rows, n_classes, itemsize, max_rows):
    """Pick a batch-tile row count: multiple of 8, ~4 MiB of VMEM per buffer."""
    n_pad = ((n_rows + 7) // 8) * 8
    # Per-row VMEM bytes: preds row + lane-padded (x128) int32 target row.
    per_row = n_classes * itemsize + 128 * 4
    budget = 4 * 1024 * 1024   # ~4 MiB/tile -> ~8 MiB double-buffered
    tb = max(8, (budget // per_row) // 8 * 8)
    if max_rows is not None:
        tb = min(tb, max(8, (max_rows // 8) * 8))
    return min(tb, n_pad)


@functools.partial(
    jax.jit, static_argnames=("epsilon", "reduction", "max_rows_per_tile"))
def label_smoothing_cross_entropy(preds, target, *, epsilon=0.1,
                                  reduction="mean", max_rows_per_tile=None):
    """Pallas implementation of LabelSmoothingCrossEntropy.forward.

    preds : (N, C) float array of logits (f32 or bf16; upcast on-chip)
    target: (N,)   int array of class indices
    """
    n_rows, n_classes = preds.shape
    target2d = target.astype(jnp.int32).reshape(n_rows, 1)

    tile_rows = _choose_tile_rows(n_rows, n_classes,
                                  jnp.dtype(preds.dtype).itemsize,
                                  max_rows_per_tile)
    num_tiles = pl.cdiv(n_rows, tile_rows)

    kernel = functools.partial(_lsce_kernel, n_rows=n_rows,
                               n_classes=n_classes, tile_rows=tile_rows)

    partials = pl.pallas_call(
        kernel,
        out_shape=jax.ShapeDtypeStruct((num_tiles, 8, 128), jnp.float32),
        grid_spec=pltpu.PrefetchScalarGridSpec(
            num_scalar_prefetch=0,
            grid=(num_tiles,),
            in_specs=[
                pl.BlockSpec((tile_rows, n_classes), lambda i: (i, 0)),
                pl.BlockSpec((tile_rows, 1), lambda i: (i, 0)),
            ],
            out_specs=pl.BlockSpec((1, 8, 128), lambda i: (i, 0, 0)),
        ),
        compiler_params=pltpu.CompilerParams(
            dimension_semantics=("parallel",)),
    )(preds, target2d)

    # Tiny cross-tile reduction in plain JAX (also keeps f32 accumulation
    # per-tile rather than one long serial chain).
    sum_all = jnp.sum(partials[:, 0, 0])
    sum_nll = jnp.sum(partials[:, 0, 1])

    if reduction == "mean":
        loss = sum_all / n_rows
        nll = sum_nll / n_rows
    elif reduction == "sum":
        loss = sum_all
        nll = sum_nll
    else:
        # TODO(synk): reduction='none' returns per-row losses in PyTorch;
        # only 'mean' / 'sum' reductions are implemented here.
        raise NotImplementedError("reduction='none' not supported")

    # linear_combination(nll, loss / n, epsilon)
    return (1.0 - epsilon) * nll + epsilon * (loss / n_classes)


def _reference(preds, target, epsilon=0.1):
    """Pure-JAX reference mirroring the PyTorch forward (reduction='mean')."""
    logp = jax.nn.log_softmax(preds.astype(jnp.float32), axis=-1)
    loss = jnp.mean(-jnp.sum(logp, axis=-1))
    nll = jnp.mean(-jnp.take_along_axis(logp, target[:, None], axis=-1)[:, 0])
    n = preds.shape[-1]
    return (1.0 - epsilon) * nll + epsilon * (loss / n)


if __name__ == "__main__":
    key = jax.random.PRNGKey(0)
    k1, k2, k3, k4 = jax.random.split(key, 4)

    # Test 1: basic single-tile case (batch=8, classes=32), f32 logits.
    N, C = 8, 32
    preds = jax.random.normal(k1, (N, C), dtype=jnp.float32)
    target = jax.random.randint(k2, (N,), 0, C, dtype=jnp.int32)
    out = jax.block_until_ready(
        label_smoothing_cross_entropy(preds, target, epsilon=0.1))
    ref = _reference(preds, target, epsilon=0.1)
    assert jnp.allclose(out, ref, atol=1e-5, rtol=1e-5), (out, ref)

    # Test 2: multi-tile grid with a remainder tile (N=20, TB capped at 8
    # -> 3 tiles, last tile has 4 valid rows) exercising the row mask and the
    # "parallel" per-tile partial outputs.
    N2, C2 = 20, 32
    preds2 = jax.random.normal(k3, (N2, C2), dtype=jnp.float32)
    target2 = jax.random.randint(k4, (N2,), 0, C2, dtype=jnp.int32)
    out2 = jax.block_until_ready(
        label_smoothing_cross_entropy(preds2, target2, epsilon=0.1,
                                      max_rows_per_tile=8))
    ref2 = _reference(preds2, target2, epsilon=0.1)
    assert jnp.allclose(out2, ref2, atol=1e-5, rtol=1e-5), (out2, ref2)

    # Test 3: bf16 logits fed directly (no wrapper-side f32 copy in HBM).
    preds_bf16 = preds.astype(jnp.bfloat16)
    out3 = jax.block_until_ready(
        label_smoothing_cross_entropy(preds_bf16, target, epsilon=0.1))
    ref3 = _reference(preds_bf16, target, epsilon=0.1)
    assert jnp.allclose(out3, ref3, atol=1e-4, rtol=1e-4), (out3, ref3)

    print("KERNEL_OK")
</pallas_src>

<mosaic_0001>
module attributes {stable_mosaic.version = 11 : i64} {
  func.func @_lsce_kernel(%arg0: i32, %arg1: memref<8x32xf32, #tpu.memory_space<vmem>>, %arg2: memref<8x1xi32, #tpu.memory_space<vmem>>, %arg3: memref<1x8x128xf32, #tpu.memory_space<vmem>>) attributes {dimension_semantics = [#tpu.dimension_semantics<parallel>], iteration_bounds = array<i64: 1>, scalar_prefetch = 0 : i64, scratch_operands = 0 : i64, tpu.core_type = #tpu.core_type<tc>, window_params = [{transform_indices = @transform_0, window_bounds = array<i64: 8, 32>}, {transform_indices = @transform_1, window_bounds = array<i64: 8, 1>}, {transform_indices = @transform_2, window_bounds = array<i64: 1, 8, 128>}]} {
    %c0 = arith.constant 0 : index
    %c0_0 = arith.constant 0 : index
    %0 = vector.load %arg1[%c0, %c0_0] : memref<8x32xf32, #tpu.memory_space<vmem>>, vector<8x32xf32>
    %c0_1 = arith.constant 0 : index
    %c0_2 = arith.constant 0 : index
    %1 = vector.load %arg2[%c0_1, %c0_2] : memref<8x1xi32, #tpu.memory_space<vmem>>, vector<8x1xi32>
    %c8_i32 = arith.constant 8 : i32
    %2 = arith.muli %arg0, %c8_i32 : i32
    %3 = tpu.iota {dimensions = array<i32: 0>} : vector<8x1xi32>
    %4 = vector.broadcast %2 : i32 to vector<8x1xi32>
    %5 = arith.addi %4, %3 : vector<8x1xi32>
    %c8_i32_3 = arith.constant 8 : i32
    %6 = vector.broadcast %c8_i32_3 : i32 to vector<8x1xi32>
    %7 = arith.cmpi slt, %5, %6 : vector<8x1xi32>
    %cst = arith.constant 0.000000e+00 : f32
    %8 = vector.shape_cast %7 : vector<8x1xi1> to vector<8x1xi1>
    %9 = vector.broadcast %8 : vector<8x1xi1> to vector<8x32xi1>
    %10 = vector.broadcast %cst : f32 to vector<8x32xf32>
    %11 = arith.select %9, %0, %10 : vector<8x32xi1>, vector<8x32xf32>
    %cst_4 = arith.constant dense<0xFF800000> : vector<8xf32>
    %12 = vector.multi_reduction <maximumf>, %11, %cst_4 [1] : vector<8x32xf32> to vector<8xf32>
    %13 = vector.shape_cast %12 : vector<8xf32> to vector<8x1xf32>
    %14 = vector.broadcast %13 : vector<8x1xf32> to vector<8x32xf32>
    %15 = arith.subf %11, %14 : vector<8x32xf32>
    %16 = math.exp %15 : vector<8x32xf32>
    %cst_5 = arith.constant dense<0.000000e+00> : vector<8xf32>
    %17 = vector.multi_reduction <add>, %16, %cst_5 [1] : vector<8x32xf32> to vector<8xf32>
    %18 = vector.shape_cast %17 : vector<8xf32> to vector<8x1xf32>
    %19 = math.log %18 : vector<8x1xf32>
    %20 = arith.addf %13, %19 : vector<8x1xf32>
    %cst_6 = arith.constant dense<0.000000e+00> : vector<8xf32>
    %21 = vector.multi_reduction <add>, %11, %cst_6 [1] : vector<8x32xf32> to vector<8xf32>
    %22 = vector.shape_cast %21 : vector<8xf32> to vector<8x1xf32>
    %23 = tpu.iota {dimensions = array<i32: 1>} : vector<8x32xi32>
    %24 = vector.broadcast %1 : vector<8x1xi32> to vector<8x32xi32>
    %25 = arith.cmpi eq, %23, %24 : vector<8x32xi32>
    %cst_7 = arith.constant 0.000000e+00 : f32
    %26 = vector.broadcast %cst_7 : f32 to vector<8x32xf32>
    %27 = arith.select %25, %11, %26 : vector<8x32xi1>, vector<8x32xf32>
    %cst_8 = arith.constant dense<0.000000e+00> : vector<8xf32>
    %28 = vector.multi_reduction <add>, %27, %cst_8 [1] : vector<8x32xf32> to vector<8xf32>
    %29 = vector.shape_cast %28 : vector<8xf32> to vector<8x1xf32>
    %cst_9 = arith.constant 3.200000e+01 : f32
    %30 = vector.broadcast %cst_9 : f32 to vector<8x1xf32>
    %31 = arith.mulf %30, %20 : vector<8x1xf32>
    %32 = arith.subf %31, %22 : vector<8x1xf32>
    %cst_10 = arith.constant 0.000000e+00 : f32
    %33 = vector.broadcast %cst_10 : f32 to vector<8x1xf32>
    %34 = arith.select %7, %32, %33 : vector<8x1xi1>, vector<8x1xf32>
    %35 = vector.shape_cast %34 : vector<8x1xf32> to vector<1x8x1xf32>
    %cst_11 = arith.constant dense<0.000000e+00> : vector<1xf32>
    %36 = vector.multi_reduction <add>, %35, %cst_11 [1, 2] : vector<1x8x1xf32> to vector<1xf32>
    %37 = vector.shape_cast %36 : vector<1xf32> to vector<1x1x1xf32>
    %38 = vector.extract %37[0, 0, 0] : f32 from vector<1x1x1xf32>
    %39 = arith.subf %20, %29 : vector<8x1xf32>
    %cst_12 = arith.constant 0.000000e+00 : f32
    %40 = vector.broadcast %cst_12 : f32 to vector<8x1xf32>
    %41 = arith.select %7, %39, %40 : vector<8x1xi1>, vector<8x1xf32>
    %42 = vector.shape_cast %41 : vector<8x1xf32> to vector<1x8x1xf32>
    %cst_13 = arith.constant dense<0.000000e+00> : vector<1xf32>
    %43 = vector.multi_reduction <add>, %42, %cst_13 [1, 2] : vector<1x8x1xf32> to vector<1xf32>
    %44 = vector.shape_cast %43 : vector<1xf32> to vector<1x1x1xf32>
    %45 = vector.extract %44[0, 0, 0] : f32 from vector<1x1x1xf32>
    %46 = tpu.iota {dimensions = array<i32: 1>} : vector<1x8x128xi32>
    %47 = tpu.iota {dimensions = array<i32: 2>} : vector<1x8x128xi32>
    %c0_i32 = arith.constant 0 : i32
    %48 = vector.broadcast %c0_i32 : i32 to vector<1x8x128xi32>
    %49 = arith.cmpi eq, %46, %48 : vector<1x8x128xi32>
    %c0_i32_14 = arith.constant 0 : i32
    %50 = vector.broadcast %c0_i32_14 : i32 to vector<1x8x128xi32>
    %51 = arith.cmpi eq, %47, %50 : vector<1x8x128xi32>
    %52 = arith.andi %49, %51 : vector<1x8x128xi1>
    %c1_i32 = arith.constant 1 : i32
    %53 = vector.broadcast %c1_i32 : i32 to vector<1x8x128xi32>
    %54 = arith.cmpi eq, %47, %53 : vector<1x8x128xi32>
    %55 = arith.andi %49, %54 : vector<1x8x128xi1>
    %cst_15 = arith.constant 0.000000e+00 : f32
    %56 = vector.broadcast %45 : f32 to vector<1x8x128xf32>
    %57 = vector.broadcast %cst_15 : f32 to vector<1x8x128xf32>
    %58 = arith.select %55, %56, %57 : vector<1x8x128xi1>, vector<1x8x128xf32>
    %59 = vector.broadcast %38 : f32 to vector<1x8x128xf32>
    %60 = arith.select %52, %59, %58 : vector<1x8x128xi1>, vector<1x8x128xf32>
    %c0_16 = arith.constant 0 : index
    %c0_17 = arith.constant 0 : index
    %c0_18 = arith.constant 0 : index
    %61 = vector.load %arg3[%c0_16, %c0_17, %c0_18] : memref<1x8x128xf32, #tpu.memory_space<vmem>>, vector<1x8x128xf32>
    tpu.vector_store %arg3[%c0_16, %c0_17, %c0_18], %60 {strides = array<i32>} : memref<1x8x128xf32, #tpu.memory_space<vmem>>, vector<1x8x128xf32>,
    return
  }
  func.func @transform_0(%arg0: i32) -> (i32, i32) {
    %c0_i32 = arith.constant 0 : i32
    %c0_i32_0 = arith.constant 0 : i32
    return %arg0, %c0_i32 : i32, i32
  }
  func.func @transform_1(%arg0: i32) -> (i32, i32) {
    %c0_i32 = arith.constant 0 : i32
    %c0_i32_0 = arith.constant 0 : i32
    return %arg0, %c0_i32 : i32, i32
  }
  func.func @transform_2(%arg0: i32) -> (i32, i32, i32) {
    %c0_i32 = arith.constant 0 : i32
    %c0_i32_0 = arith.constant 0 : i32
    %c0_i32_1 = arith.constant 0 : i32
    return %arg0, %c0_i32, %c0_i32_0 : i32, i32, i32
  }
}

</mosaic_0001>

<llo_original>
// kernel: label_smoothing_cross_entropy.1
$region0: #{label_smoothing_cross_entropy.1}
  #allocation0 [shape = 'u32[]', space=smem, size = 0x4, offset = 0x4, fixed_abs, tag = 'smem constant byte address 0x4 - core index']
  #allocation1 [shape = 'u32[72,128]{1,0:T(1,128)}', space=vmem, size = 0x9000, scoped, tag = 'internal scratch']
  %s0 = inlined_call_operand.vmem [shape: f32[8,32], index: 0, kind: input, shape index: {}]
  %s1 = inlined_call_operand.vmem [shape: s32[8,1], index: 1, kind: input, shape index: {}]
  %s2 = inlined_call_operand.vmem [shape: f32[1,8,128], index: 2, kind: output, shape index: {}]
  %s3 = sld [smem:[#allocation0]]
  $region18: #{label_smoothing_cross_entropy.1} parent=0
    _
  %s5 = ssub.s32 1, %s3
  %s6 = scalar_select 0, %s5, %s3
  // Predicated region
  $region2: #{label_smoothing_cross_entropy.1} parent=0 // pred_check
    _
  $region3: #{label_smoothing_cross_entropy.1} parent=0 // pred_check_branch
    %8 = sbr.rel (0) target = $region5
  $region4: #{label_smoothing_cross_entropy.1} parent=0 // pred_region
    _
  $region5: #{label_smoothing_cross_entropy.1} parent=0 // pred_fallthru
    _
  // Predicated region
  $region6: #{label_smoothing_cross_entropy.1} parent=0 // pred_check
    _
  $region7: #{label_smoothing_cross_entropy.1} parent=0 // pred_check_branch
    %10 = sbr.rel (0) target = $region9
  $region8: #{label_smoothing_cross_entropy.1} parent=0 // pred_region
    _
  $region9: #{label_smoothing_cross_entropy.1} parent=0 // pred_fallthru
    _
  %v11 = vld [vmem:[%s0] sm:$0xff]
  %v12 = vld [vmem:[%s1] sm:$0xff]
  %s13 = smul.u32 0, 8
  %v14 = vlaneseq
  %v15 = vshrl.u32 %v14, 7
  %v16 = vstv %s13
  %v17 = vadd.s32 %v16, %v15
  %vm18 = vcmp.lt.s32.totalorder %v17, 8
  %v19 = vsel %vm18, 1, 0
  %vm20 = vcmp.eq.s32.totalorder %v19, 1
  %v21 = vsel %vm20, %v11, 0.0
  %vm22 = vcmask 261120
  %v23 = vsel %vm22, %v21, -inf
  %24 = vmax.xlane.f32.xlu0 %v23
  %v25 = vpop.xlane.xlu0 %24
  %v26 = vsub.f32 %v21, %v25
  %v27 = vmul.f32 %v26, 1.442695
  %v28 = vpow.pop %v27
  %v29 = vsel %vm22, %v28, 0.0
  %30 = vadd.xlane.f32.xlu0 %v29
  %v31 = vpop.xlane.xlu0 %30
  %v32 = vlog2.pop %v31
  %v33 = vmul.f32 %v32, 0.6931472
  %v34 = vadd.f32 %v25, %v33
  %v35 = vsel %vm22, %v21, 0.0
  %36 = vadd.xlane.f32.xlu0 %v35
  %v37 = vpop.xlane.xlu0 %36
  %v38 = vlaneseq
  %v39 = vand.u32 %v38, 127
  %40 = vset.pattern.permute.xlu0 0
  %41 = vperm.xlu0 %40, %v12
  %v42 = vpop.permute.xlu0 %41
  %vm43 = vcmp.eq.s32.totalorder %v39, %v42
  %v44 = vsel %vm43, %v21, 0.0
  %v45 = vsel %vm22, %v44, 0.0
  %46 = vadd.xlane.f32.xlu0 %v45
  %v47 = vpop.xlane.xlu0 %46
  %v48 = vmul.f32 %v34, 32.0
  %v49 = vsub.f32 %v48, %v37
  %v50 = vsel %vm18, %v49, 0.0
  %vm51 = vcmask 7168
  %v52 = vsel %vm51, %v50, 0.0
  %53 = vadd.xlane.f32.xlu0 %v52
  %v54 = vpop.xlane.xlu0 %53
  %v55 = vrot.slane %v54, 4
  %v56 = vadd.f32 %v54, %v55
  %v57 = vrot.slane %v56, 2
  %v58 = vadd.f32 %v56, %v57
  %v59 = vrot.slane %v58, 1
  %v60 = vadd.f32 %v58, %v59
  %s61 = vtos %v60
  %v62 = vsub.f32 %v34, %v47
  %v63 = vsel %vm18, %v62, 0.0
  %v64 = vsel %vm51, %v63, 0.0
  %65 = vadd.xlane.f32.xlu0 %v64
  %v66 = vpop.xlane.xlu0 %65
  %v67 = vrot.slane %v66, 4
  %v68 = vadd.f32 %v66, %v67
  %v69 = vrot.slane %v68, 2
  %v70 = vadd.f32 %v68, %v69
  %v71 = vrot.slane %v70, 1
  %v72 = vadd.f32 %v70, %v71
  %s73 = vtos %v72
  %vm74 = vcmp.eq.s32.totalorder %v15, 0
  %vm75 = vcmp.eq.s32.totalorder %v39, 0
  %vm76 = vmand %vm74, %vm75
  %vm77 = vcmp.eq.s32.totalorder %v39, 1
  %vm78 = vmand %vm74, %vm77
  %v79 = vstv %s73
  %v80 = vsel %vm78, %v79, 0.0
  %v81 = vstv %s61
  %v82 = vsel %vm76, %v81, %v80
  %83 = vst [vmem:[%s2] sm:$0xff] %v82
  // Predicated region
  $region10: #{label_smoothing_cross_entropy.1} parent=0 // pred_check
    _
  $region11: #{label_smoothing_cross_entropy.1} parent=0 // pred_check_branch
    %85 = sbr.rel (0) target = $region13
  $region12: #{label_smoothing_cross_entropy.1} parent=0 // pred_region
    _
  $region13: #{label_smoothing_cross_entropy.1} parent=0 // pred_fallthru
    _
  // Predicated region
  $region14: #{label_smoothing_cross_entropy.1} parent=0 // pred_check
    _
  $region15: #{label_smoothing_cross_entropy.1} parent=0 // pred_check_branch
    %87 = sbr.rel (0) target = $region17
  $region16: #{label_smoothing_cross_entropy.1} parent=0 // pred_region
    _
  $region17: #{label_smoothing_cross_entropy.1} parent=0 // pred_fallthru
    _

</llo_original>
